<compile_context>
chip_gen: v7x
topology: tpu7x:2x2x1
jax: 0.10.0
libtpu: 0.0.40
codegen_flags: <defaults>
</compile_context>

<pallas_src>
import functools

import jax
import jax.numpy as jnp
import numpy as np
from jax.experimental import pallas as pl
from jax.experimental.pallas import tpu as pltpu


def _trans_cell_kernel(q_ref, tm_ref, rmask_ref, zl_ref,
                       wt_ref, bt_ref, wb_ref, g_ref, b0_ref,
                       out_ref):
    """One batch block per grid step; everything lane-dense in VMEM."""
    bb, n, ne = tm_ref.shape

    q = q_ref[...]                                                         # [bb, H]

    # Per-batch effective edge weights, already tiled xN along the lane axis
    # to line up with the [bb, N, N*E] trans_mat layout (C folded in wrapper).
    w_eff = jnp.dot(q, wt_ref[...],
                    preferred_element_type=jnp.float32) + bt_ref[...]      # [bb, N*E]

    # Per-batch scalar bias. (Softmax over dim=1 is invariant to it, but it is
    # kept so `relation` matches the reference exactly; cost is negligible.)
    b_eff = jnp.sum(q * wb_ref[...], axis=-1, keepdims=True) + b0_ref[0, 0]  # [bb, 1]

    # relation[b,i,j] = sum_e tm[b,i,j,e] * w_eff[b,e] + b_eff[b]
    # Lane-dense VPU multiply, then the grouped reduce over E done as one MXU
    # matmul against the constant [N*E, N] 0/1 grouping matrix.
    scaled = tm_ref[...] * w_eff[:, None, :]                               # [bb, N, N*E]
    rel = jnp.dot(scaled.reshape(bb * n, ne), g_ref[...],
                  preferred_element_type=jnp.float32)                      # [bb*N, N]
    relation = rel.reshape(bb, n, n) + b_eff[:, :, None]                   # [bb, N, N]

    # Masked softmax over axis=1 (PyTorch dim=1 of [B, N, N]). Finite sentinel
    # instead of -inf: identical whenever a column has at least one unmasked
    # entry, and avoids inf - inf -> NaN otherwise.
    rmask = rmask_ref[...]                                                 # [bb, N, N]
    relation = jnp.where(rmask == 0.0, jnp.float32(-1e30), relation)
    m = jnp.max(relation, axis=1, keepdims=True)                           # [bb, 1, N]
    e = jnp.exp(relation - m)
    denom = jnp.sum(e, axis=1, keepdims=True)                              # [bb, 1, N]
    inv = pl.reciprocal(denom, approx=True)          # EUP fast path
    inv = inv * (2.0 - denom * inv)                  # one Newton step -> f32 accuracy
    rel_mat = e * inv                                                      # [bb, N, N]

    # logits[b, i] = sum_j rel_mat[b, i, j] * z_logits[b, j]
    out_ref[...] = jnp.sum(rel_mat * zl_ref[...][:, None, :], axis=-1)     # [bb, N]


def _pick_batch_block(B, N, E, target_bytes=2 << 20):
    """Largest multiple-of-8 divisor of B whose trans_mat tile <= ~2 MiB."""
    per_elem = N * N * E * 4  # f32 bytes of trans_mat per batch element
    cands = [d for d in range(8, B + 1, 8)
             if B % d == 0 and d * per_elem <= target_bytes]
    return max(cands) if cands else B


@functools.partial(jax.jit, static_argnames=("batch_block",))
def trans_cell(q, trans_mat, r_mask, z_logits, params, *, batch_block=None):
    B, N, _, E = trans_mat.shape
    H = q.shape[1]
    NE = N * E

    # Batch tiling: multiple-of-8 blocks with ~2 MiB trans_mat tiles so the
    # pipeline double-buffers DMA against compute on every generation (fits
    # the v5e 16 MiB scoped-VMEM default; on v7x pass a smaller batch_block so
    # each TensorCore still gets several pipelined steps under "parallel").
    if batch_block is None:
        batch_block = _pick_batch_block(B, N, E)
    assert B % batch_block == 0, "batch_block must divide B"
    assert batch_block == B or batch_block % 8 == 0, \
        "batch_block must be a multiple of 8 (or the whole batch)"
    bb = batch_block
    grid = (B // bb,)

    # ---- One-time wrapper-side algebra: fold the C-dim hidden path. ----
    #   relation = ((tm @ Wr + br) * (q @ Wq + bq)) @ wo + bo
    #            = tm . w_eff(q) + b_eff(q)
    wo = params["wo"]                              # [C, 1]
    gated_wr = wo * params["wr"].T                 # [C, E]   (diag(wo) @ Wr^T)
    w_qr = params["wq"] @ gated_wr                 # [H, E]
    b_qr = params["bq"] @ gated_wr                 # [1, E]
    gated_br = wo * params["br"].T                 # [C, 1]
    w_b_row = (params["wq"] @ gated_br).T          # [1, H]
    b_b = params["bq"] @ gated_br + params["bo"]   # [1, 1]  -> SMEM scalar

    # Lane-dense layouts: trans_mat -> [B, N, N*E] (contiguous, free) and
    # W_qr / b_qr tiled xN so the q-matmul output is already lane-tiled.
    tm2 = trans_mat.reshape(B, N, NE)
    w_tiled = jnp.tile(w_qr, (1, N))               # [H, N*E]
    b_tiled = jnp.tile(b_qr, (1, N))               # [1, N*E]
    # Constant 0/1 grouping matrix: column j sums lanes [j*E, (j+1)*E).
    g = jnp.repeat(jnp.eye(N, dtype=jnp.float32), E, axis=0)   # [N*E, N]

    in_specs = [
        pl.BlockSpec((bb, H), lambda b: (b, 0)),              # q
        pl.BlockSpec((bb, N, NE), lambda b: (b, 0, 0)),       # trans_mat, lane-dense
        pl.BlockSpec((bb, N, N), lambda b: (b, 0, 0)),        # r_mask
        pl.BlockSpec((bb, N), lambda b: (b, 0)),              # z_logits
        pl.BlockSpec((H, NE), lambda b: (0, 0)),              # W_qr tiled xN
        pl.BlockSpec((1, NE), lambda b: (0, 0)),              # b_qr tiled xN
        pl.BlockSpec((1, H), lambda b: (0, 0)),               # w_b row
        pl.BlockSpec((NE, N), lambda b: (0, 0)),              # grouping matrix
        pl.BlockSpec(memory_space=pltpu.MemorySpace.SMEM),    # b_b scalar in SMEM
    ]
    out_specs = pl.BlockSpec((bb, N), lambda b: (b, 0))

    return pl.pallas_call(
        _trans_cell_kernel,
        out_shape=jax.ShapeDtypeStruct((B, N), jnp.float32),
        grid_spec=pltpu.PrefetchScalarGridSpec(
            num_scalar_prefetch=0,
            grid=grid,
            in_specs=in_specs,
            out_specs=out_specs,
        ),
        compiler_params=pltpu.CompilerParams(
            dimension_semantics=("parallel",),
            vmem_limit_bytes=32 * 1024 * 1024,
        ),
    )(q, tm2, r_mask, z_logits, w_tiled, b_tiled, w_b_row, g, b_b)


def trans_cell_reference(q, trans_mat, r_mask, z_logits, params):
    """Pure-JAX reference mirroring the PyTorch forward (unfolded math)."""
    tm_proj = trans_mat @ params["wr"] + params["br"]                # [B,N,N,C]
    q_proj = q @ params["wq"] + params["bq"]                         # [B,C]
    prod = tm_proj * q_proj[:, None, None, :]
    relation = (prod @ params["wo"])[..., 0] + params["bo"][0, 0]    # [B,N,N]
    relation = jnp.where(r_mask == 0.0, -jnp.inf, relation)
    rel_mat = jax.nn.softmax(relation, axis=1)                       # dim=1
    logits = jnp.einsum("bij,bj->bi", rel_mat, z_logits)
    return logits


if __name__ == "__main__":
    # Small shapes consistent with the module (N*E = 128 -> lane-dense tiles).
    B, N, E, H, C = 2, 8, 16, 32, 256

    key = jax.random.PRNGKey(0)
    keys = jax.random.split(key, 10)

    q = jax.random.normal(keys[0], (B, H), jnp.float32)
    trans_mat = jax.random.normal(keys[1], (B, N, N, E), jnp.float32)
    z_logits = jax.random.normal(keys[2], (B, N), jnp.float32)

    # Mask: bernoulli, but force the diagonal on so every softmax column
    # (dim=1 slice) has at least one unmasked entry (matches the ref exactly).
    r_mask = jax.random.bernoulli(keys[3], 0.6, (B, N, N)).astype(jnp.float32)
    r_mask = jnp.maximum(r_mask, jnp.eye(N, dtype=jnp.float32)[None])

    scale = 0.05
    params = {
        "wq": scale * jax.random.normal(keys[4], (H, C), jnp.float32),
        "bq": scale * jax.random.normal(keys[5], (1, C), jnp.float32),
        "wr": scale * jax.random.normal(keys[6], (E, C), jnp.float32),
        "br": scale * jax.random.normal(keys[7], (1, C), jnp.float32),
        "wo": scale * jax.random.normal(keys[8], (C, 1), jnp.float32),
        "bo": scale * jax.random.normal(keys[9], (1, 1), jnp.float32),
    }

    out = trans_cell(q, trans_mat, r_mask, z_logits, params)
    out = jax.block_until_ready(out)

    ref = trans_cell_reference(q, trans_mat, r_mask, z_logits, params)
    # Slightly relaxed tolerance: the deeper algebraic fold changes f32
    # summation order relative to the unfolded reference.
    np.testing.assert_allclose(np.asarray(out), np.asarray(ref),
                               rtol=5e-5, atol=5e-5)

    print("KERNEL_OK")
</pallas_src>

<mosaic_0001>
module attributes {stable_mosaic.version = 11 : i64} {
  func.func @_trans_cell_kernel(%arg0: i32, %arg1: memref<2x32xf32, #tpu.memory_space<vmem>>, %arg2: memref<2x8x128xf32, #tpu.memory_space<vmem>>, %arg3: memref<2x8x8xf32, #tpu.memory_space<vmem>>, %arg4: memref<2x8xf32, #tpu.memory_space<vmem>>, %arg5: memref<32x128xf32, #tpu.memory_space<vmem>>, %arg6: memref<1x128xf32, #tpu.memory_space<vmem>>, %arg7: memref<1x32xf32, #tpu.memory_space<vmem>>, %arg8: memref<128x8xf32, #tpu.memory_space<vmem>>, %arg9: memref<1x1xf32, #tpu.memory_space<smem>>, %arg10: memref<2x8xf32, #tpu.memory_space<vmem>>) attributes {dimension_semantics = [#tpu.dimension_semantics<parallel>], iteration_bounds = array<i64: 1>, scalar_prefetch = 0 : i64, scratch_operands = 0 : i64, tpu.core_type = #tpu.core_type<tc>, window_params = [{transform_indices = @transform_0, window_bounds = array<i64: 2, 32>}, {transform_indices = @transform_1, window_bounds = array<i64: 2, 8, 128>}, {transform_indices = @transform_2, window_bounds = array<i64: 2, 8, 8>}, {transform_indices = @transform_3, window_bounds = array<i64: 2, 8>}, {pipeline_mode = #tpu.pipeline_mode<synchronous>, transform_indices = @transform_4, window_bounds = array<i64: 32, 128>}, {pipeline_mode = #tpu.pipeline_mode<synchronous>, transform_indices = @transform_5, window_bounds = array<i64: 1, 128>}, {pipeline_mode = #tpu.pipeline_mode<synchronous>, transform_indices = @transform_6, window_bounds = array<i64: 1, 32>}, {pipeline_mode = #tpu.pipeline_mode<synchronous>, transform_indices = @transform_7, window_bounds = array<i64: 128, 8>}, {transform_indices = @transform_8, window_bounds = array<i64: 1, 1>}, {transform_indices = @transform_9, window_bounds = array<i64: 2, 8>}]} {
    %c0 = arith.constant 0 : index
    %c0_0 = arith.constant 0 : index
    %0 = vector.load %arg1[%c0, %c0_0] : memref<2x32xf32, #tpu.memory_space<vmem>>, vector<2x32xf32>
    %c0_1 = arith.constant 0 : index
    %c0_2 = arith.constant 0 : index
    %1 = vector.load %arg5[%c0_1, %c0_2] : memref<32x128xf32, #tpu.memory_space<vmem>>, vector<32x128xf32>
    %cst = arith.constant dense<0.000000e+00> : vector<2x128xf32>
    %2 = tpu.matmul %0, %1, %cst {dimension_numbers = #tpu.dot_dimension_numbers<[1], [0], [0], [1], [0, 0, 1, 1], [], []>} : vector<2x32xf32>, vector<32x128xf32>, vector<2x128xf32> -> vector<2x128xf32>
    %c0_3 = arith.constant 0 : index
    %c0_4 = arith.constant 0 : index
    %3 = vector.load %arg6[%c0_3, %c0_4] : memref<1x128xf32, #tpu.memory_space<vmem>>, vector<1x128xf32>
    %4 = vector.broadcast %3 : vector<1x128xf32> to vector<2x128xf32>
    %5 = arith.addf %2, %4 : vector<2x128xf32>
    %c0_5 = arith.constant 0 : index
    %c0_6 = arith.constant 0 : index
    %6 = vector.load %arg7[%c0_5, %c0_6] : memref<1x32xf32, #tpu.memory_space<vmem>>, vector<1x32xf32>
    %7 = vector.broadcast %6 : vector<1x32xf32> to vector<2x32xf32>
    %8 = arith.mulf %0, %7 : vector<2x32xf32>
    %cst_7 = arith.constant dense<0.000000e+00> : vector<2xf32>
    %9 = vector.multi_reduction <add>, %8, %cst_7 [1] : vector<2x32xf32> to vector<2xf32>
    %10 = vector.shape_cast %9 : vector<2xf32> to vector<2x1xf32>
    %c0_8 = arith.constant 0 : index
    %c0_9 = arith.constant 0 : index
    %11 = memref.load %arg9[%c0_8, %c0_9] : memref<1x1xf32, #tpu.memory_space<smem>>
    %12 = vector.broadcast %11 : f32 to vector<2x1xf32>
    %13 = arith.addf %10, %12 : vector<2x1xf32>
    %c0_10 = arith.constant 0 : index
    %c0_11 = arith.constant 0 : index
    %c0_12 = arith.constant 0 : index
    %14 = vector.load %arg2[%c0_10, %c0_11, %c0_12] : memref<2x8x128xf32, #tpu.memory_space<vmem>>, vector<2x8x128xf32>
    %15 = vector.shape_cast %5 : vector<2x128xf32> to vector<2x1x128xf32>
    %16 = vector.broadcast %15 : vector<2x1x128xf32> to vector<2x8x128xf32>
    %17 = arith.mulf %14, %16 : vector<2x8x128xf32>
    %18 = vector.shape_cast %17 : vector<2x8x128xf32> to vector<16x128xf32>
    %c0_13 = arith.constant 0 : index
    %c0_14 = arith.constant 0 : index
    %19 = vector.load %arg8[%c0_13, %c0_14] : memref<128x8xf32, #tpu.memory_space<vmem>>, vector<128x8xf32>
    %cst_15 = arith.constant dense<0.000000e+00> : vector<16x8xf32>
    %20 = tpu.matmul %18, %19, %cst_15 {dimension_numbers = #tpu.dot_dimension_numbers<[1], [0], [0], [1], [0, 0, 1, 1], [], []>} : vector<16x128xf32>, vector<128x8xf32>, vector<16x8xf32> -> vector<16x8xf32>
    %21 = vector.shape_cast %20 : vector<16x8xf32> to vector<2x8x8xf32>
    %22 = vector.shape_cast %13 : vector<2x1xf32> to vector<2x1x1xf32>
    %23 = vector.broadcast %22 : vector<2x1x1xf32> to vector<2x8x8xf32>
    %24 = arith.addf %21, %23 : vector<2x8x8xf32>
    %c0_16 = arith.constant 0 : index
    %c0_17 = arith.constant 0 : index
    %c0_18 = arith.constant 0 : index
    %25 = vector.load %arg3[%c0_16, %c0_17, %c0_18] : memref<2x8x8xf32, #tpu.memory_space<vmem>>, vector<2x8x8xf32>
    %cst_19 = arith.constant 0.000000e+00 : f32
    %26 = vector.broadcast %cst_19 : f32 to vector<2x8x8xf32>
    %27 = arith.cmpf oeq, %25, %26 : vector<2x8x8xf32>
    %cst_20 = arith.constant -1.000000e+30 : f32
    %28 = vector.broadcast %cst_20 : f32 to vector<2x8x8xf32>
    %29 = arith.select %27, %28, %24 : vector<2x8x8xi1>, vector<2x8x8xf32>
    %cst_21 = arith.constant dense<0xFF800000> : vector<2x8xf32>
    %30 = vector.multi_reduction <maximumf>, %29, %cst_21 [1] : vector<2x8x8xf32> to vector<2x8xf32>
    %31 = vector.shape_cast %30 : vector<2x8xf32> to vector<2x1x8xf32>
    %32 = vector.broadcast %31 : vector<2x1x8xf32> to vector<2x8x8xf32>
    %33 = arith.subf %29, %32 : vector<2x8x8xf32>
    %34 = math.exp %33 : vector<2x8x8xf32>
    %cst_22 = arith.constant dense<0.000000e+00> : vector<2x8xf32>
    %35 = vector.multi_reduction <add>, %34, %cst_22 [1] : vector<2x8x8xf32> to vector<2x8xf32>
    %36 = vector.shape_cast %35 : vector<2x8xf32> to vector<2x1x8xf32>
    %37 = tpu.reciprocal %36 {approx = true} : vector<2x1x8xf32> -> vector<2x1x8xf32>
    %38 = arith.mulf %36, %37 : vector<2x1x8xf32>
    %cst_23 = arith.constant 2.000000e+00 : f32
    %39 = vector.broadcast %cst_23 : f32 to vector<2x1x8xf32>
    %40 = arith.subf %39, %38 : vector<2x1x8xf32>
    %41 = arith.mulf %37, %40 : vector<2x1x8xf32>
    %42 = vector.broadcast %41 : vector<2x1x8xf32> to vector<2x8x8xf32>
    %43 = arith.mulf %34, %42 : vector<2x8x8xf32>
    %c0_24 = arith.constant 0 : index
    %c0_25 = arith.constant 0 : index
    %44 = vector.load %arg4[%c0_24, %c0_25] : memref<2x8xf32, #tpu.memory_space<vmem>>, vector<2x8xf32>
    %45 = vector.shape_cast %44 : vector<2x8xf32> to vector<2x1x8xf32>
    %46 = vector.broadcast %45 : vector<2x1x8xf32> to vector<2x8x8xf32>
    %47 = arith.mulf %43, %46 : vector<2x8x8xf32>
    %cst_26 = arith.constant dense<0.000000e+00> : vector<2x8xf32>
    %48 = vector.multi_reduction <add>, %47, %cst_26 [2] : vector<2x8x8xf32> to vector<2x8xf32>
    %c0_27 = arith.constant 0 : index
    %c0_28 = arith.constant 0 : index
    %49 = vector.load %arg10[%c0_27, %c0_28] : memref<2x8xf32, #tpu.memory_space<vmem>>, vector<2x8xf32>
    tpu.vector_store %arg10[%c0_27, %c0_28], %48 {strides = array<i32>} : memref<2x8xf32, #tpu.memory_space<vmem>>, vector<2x8xf32>,
    return
  }
  func.func @transform_0(%arg0: i32) -> (i32, i32) {
    %c0_i32 = arith.constant 0 : i32
    %c0_i32_0 = arith.constant 0 : i32
    return %arg0, %c0_i32 : i32, i32
  }
  func.func @transform_1(%arg0: i32) -> (i32, i32, i32) {
    %c0_i32 = arith.constant 0 : i32
    %c0_i32_0 = arith.constant 0 : i32
    %c0_i32_1 = arith.constant 0 : i32
    return %arg0, %c0_i32, %c0_i32_0 : i32, i32, i32
  }
  func.func @transform_2(%arg0: i32) -> (i32, i32, i32) {
    %c0_i32 = arith.constant 0 : i32
    %c0_i32_0 = arith.constant 0 : i32
    %c0_i32_1 = arith.constant 0 : i32
    return %arg0, %c0_i32, %c0_i32_0 : i32, i32, i32
  }
  func.func @transform_3(%arg0: i32) -> (i32, i32) {
    %c0_i32 = arith.constant 0 : i32
    %c0_i32_0 = arith.constant 0 : i32
    return %arg0, %c0_i32 : i32, i32
  }
  func.func @transform_4(%arg0: i32) -> (i32, i32) {
    %c0_i32 = arith.constant 0 : i32
    %c0_i32_0 = arith.constant 0 : i32
    %c0_i32_1 = arith.constant 0 : i32
    return %c0_i32, %c0_i32_0 : i32, i32
  }
  func.func @transform_5(%arg0: i32) -> (i32, i32) {
    %c0_i32 = arith.constant 0 : i32
    %c0_i32_0 = arith.constant 0 : i32
    %c0_i32_1 = arith.constant 0 : i32
    return %c0_i32, %c0_i32_0 : i32, i32
  }
  func.func @transform_6(%arg0: i32) -> (i32, i32) {
    %c0_i32 = arith.constant 0 : i32
    %c0_i32_0 = arith.constant 0 : i32
    %c0_i32_1 = arith.constant 0 : i32
    return %c0_i32, %c0_i32_0 : i32, i32
  }
  func.func @transform_7(%arg0: i32) -> (i32, i32) {
    %c0_i32 = arith.constant 0 : i32
    %c0_i32_0 = arith.constant 0 : i32
    %c0_i32_1 = arith.constant 0 : i32
    return %c0_i32, %c0_i32_0 : i32, i32
  }
  func.func @transform_8(%arg0: i32) -> (i32, i32) {
    %c0_i32 = arith.constant 0 : i32
    %c0_i32_0 = arith.constant 0 : i32
    %c0_i32_1 = arith.constant 0 : i32
    return %c0_i32, %c0_i32_0 : i32, i32
  }
  func.func @transform_9(%arg0: i32) -> (i32, i32) {
    %c0_i32 = arith.constant 0 : i32
    %c0_i32_0 = arith.constant 0 : i32
    return %arg0, %c0_i32 : i32, i32
  }
}

</mosaic_0001>

<llo_original>
// kernel: trans_cell.1
$region0: #{trans_cell.1}
  #allocation0 [shape = 'u32[]', space=smem, size = 0x4, offset = 0x4, fixed_abs, tag = 'smem constant byte address 0x4 - core index']
  #allocation1 [shape = 'u32[144,128]{1,0:T(1,128)}', space=vmem, size = 0x12000, scoped, tag = 'internal scratch']
  #allocation2 [shape = 'f32[1,1]{1,0:T(1,128)S(6)}', space=smem, size = 0x200, scoped, tag = 'scoped memory for trans_cell.1']
  %s0 = inlined_call_operand.vmem [shape: f32[2,32], index: 0, kind: input, shape index: {}]
  %s1 = inlined_call_operand.vmem [shape: f32[2,8,128], index: 1, kind: input, shape index: {}]
  %s2 = inlined_call_operand.vmem [shape: f32[2,8,8], index: 2, kind: input, shape index: {}]
  %s3 = inlined_call_operand.vmem [shape: f32[2,8], index: 3, kind: input, shape index: {}]
  %s4 = inlined_call_operand.vmem [shape: f32[32,128], index: 4, kind: input, shape index: {}]
  %s5 = inlined_call_operand.vmem [shape: f32[1,128], index: 5, kind: input, shape index: {}]
  %s6 = inlined_call_operand.vmem [shape: f32[1,32], index: 6, kind: input, shape index: {}]
  %s7 = inlined_call_operand.vmem [shape: f32[128,8], index: 7, kind: input, shape index: {}]
  %s8 = inlined_call_operand.<no memory space> [shape: f32[1,1], index: 8, kind: input, shape index: {}]
  %s9 = inlined_call_operand.hbm [shape: f32[2,8], index: 9, kind: output, shape index: {}]
  %s10 = sld [smem:[#allocation0]]
  $region46: #{trans_cell.1} parent=0
    _
  %s12 = ssub.s32 1, %s10
  %s13 = scalar_select 0, %s12, %s10
  %14 = sst [smem:[#allocation2]] %s8
  $region1: #{trans_cell.1} parent=0
    #allocation3 [shape = 'u8[1024]{0}', space=vmem, size = 0x400, scoped, tag = 'output window, operand 0, single buffered']
    #allocation4 [shape = 's32[1]{0}', space=sflag, size = 0x4, scoped, tag = 'scoped memory for trans_cell.1']
    %15 = vsyncpa [#allocation4], 0
    // Predicated region
    $region2: #{trans_cell.1} parent=1 // pred_check
      _
    $region3: #{trans_cell.1} parent=1 // pred_check_branch
      %17 = sbr.rel (0) target = $region5
    $region4: #{trans_cell.1} parent=1 // pred_region
      _
    $region5: #{trans_cell.1} parent=1 // pred_fallthru
      _
    // Predicated region
    $region6: #{trans_cell.1} parent=1 // pred_check
      _
    $region7: #{trans_cell.1} parent=1 // pred_check_branch
      %19 = sbr.rel (0) target = $region9
    $region8: #{trans_cell.1} parent=1 // pred_region
      _
    $region9: #{trans_cell.1} parent=1 // pred_fallthru
      _
    // Predicated region
    $region10: #{trans_cell.1} parent=1 // pred_check
      _
    $region11: #{trans_cell.1} parent=1 // pred_check_branch
      %21 = sbr.rel (0) target = $region13
    $region12: #{trans_cell.1} parent=1 // pred_region
      _
    $region13: #{trans_cell.1} parent=1 // pred_fallthru
      _
    // Predicated region
    $region14: #{trans_cell.1} parent=1 // pred_check
      _
    $region15: #{trans_cell.1} parent=1 // pred_check_branch
      %23 = sbr.rel (0) target = $region17
    $region16: #{trans_cell.1} parent=1 // pred_region
      _
    $region17: #{trans_cell.1} parent=1 // pred_fallthru
      _
    // Predicated region
    $region18: #{trans_cell.1} parent=1 // pred_check
      _
    $region19: #{trans_cell.1} parent=1 // pred_check_branch
      %25 = sbr.rel (0) target = $region21
    $region20: #{trans_cell.1} parent=1 // pred_region
      _
    $region21: #{trans_cell.1} parent=1 // pred_fallthru
      _
    // Predicated region
    $region22: #{trans_cell.1} parent=1 // pred_check
      _
    $region23: #{trans_cell.1} parent=1 // pred_check_branch
      %27 = sbr.rel (0) target = $region25
    $region24: #{trans_cell.1} parent=1 // pred_region
      _
    $region25: #{trans_cell.1} parent=1 // pred_fallthru
      _
    // Predicated region
    $region26: #{trans_cell.1} parent=1 // pred_check
      _
    $region27: #{trans_cell.1} parent=1 // pred_check_branch
      %29 = sbr.rel (0) target = $region29
    $region28: #{trans_cell.1} parent=1 // pred_region
      _
    $region29: #{trans_cell.1} parent=1 // pred_fallthru
      _
    // Predicated region
    $region30: #{trans_cell.1} parent=1 // pred_check
      _
    $region31: #{trans_cell.1} parent=1 // pred_check_branch
      %31 = sbr.rel (0) target = $region33
    $region32: #{trans_cell.1} parent=1 // pred_region
      _
    $region33: #{trans_cell.1} parent=1 // pred_fallthru
      _
    // Predicated region
    $region34: #{trans_cell.1} parent=1 // pred_check
      _
    $region35: #{trans_cell.1} parent=1 // pred_check_branch
      %33 = sbr.rel (0) target = $region37
    $region36: #{trans_cell.1} parent=1 // pred_region
      _
    $region37: #{trans_cell.1} parent=1 // pred_fallthru
      _
    %v34 = vld [vmem:[%s0] sm:$0x3]
    %v35 = vld [vmem:[%s4] sm:$0xff]
    %v36 = vld [vmem:[%s4 + $0x8] sm:$0xff]
    %v37 = vld [vmem:[%s4 + $0x10] sm:$0xff]
    %v38 = vld [vmem:[%s4 + $0x18] sm:$0xff]
    %v39 = vld [vmem:[%s5] sm:$0x1]
    %v41 = vlaneseq
    %v42 = vshrl.u32 %v41, 7
    %v43 = vsub.s32 0, %v42
    %v44 = vrot.slane %v39, %v43
    %vm46 = vcmask 261120
    %v48 = vsel %vm46, %v34, 0
    %50 = vmatprep.subr.mxu0 0.0
    %51 = vmatpush1.msra.mxu0 %v35
    %52 = vmatprep.subr.mxu0 0.0
    %53 = vmatpush1.msra.mxu0 %v36
    %54 = vmatprep.subr.mxu0 0.0
    %55 = vmatpush1.msra.mxu0 %v37
    %56 = vmatprep.subr.mxu0 0.0
    %57 = vmatpush1.msra.mxu0 %v38
    %58 = vmatprep.subr.mxu0 0.0
    %59 = vmatpush1.msra.mxu0 0.0
    %60 = vmatprep.subr.mxu0 0.0
    %61 = vmatpush1.msra.mxu0 0.0
    %62 = vmatprep.subr.mxu0 0.0
    %63 = vmatpush1.msra.mxu0 0.0
    %64 = vmatprep.subr.mxu0 0.0
    %65 = vmatpush1.msra.mxu0 0.0
    %66 = vmatprep.subr.mxu0 0.0
    %67 = vmatpush1.msra.mxu0 0.0
    %68 = vmatprep.subr.mxu0 0.0
    %69 = vmatpush1.msra.mxu0 0.0
    %70 = vmatprep.subr.mxu0 0.0
    %71 = vmatpush1.msra.mxu0 0.0
    %72 = vmatprep.subr.mxu0 0.0
    %73 = vmatpush1.msra.mxu0 0.0
    %74 = vmatprep.subr.mxu0 0.0
    %75 = vmatpush1.msra.mxu0 0.0
    %76 = vmatprep.subr.mxu0 0.0
    %77 = vmatpush1.msra.mxu0 0.0
    %78 = vmatprep.subr.mxu0 0.0
    %79 = vmatpush1.msra.mxu0 0.0
    %80 = vmatprep.subr.mxu0 0.0
    %81 = vmatpush1.msra.mxu0 0.0
    %82 = vmatprep.subr.mxu0 0.0
    %83 = vmatpush1.msra.mxu0 0.0
    %84 = vmatprep.subr.mxu0 0.0
    %85 = vmatpush1.msra.mxu0 0.0
    %86 = vmatprep.subr.mxu0 0.0
    %87 = vmatpush1.msra.mxu0 0.0
    %88 = vmatprep.subr.mxu0 0.0
    %89 = vmatpush1.msra.mxu0 0.0
    %90 = vmatprep.subr.mxu0 0.0
    %91 = vmatpush1.msra.mxu0 0.0
    %92 = vmatprep.subr.mxu0 0.0
    %93 = vmatpush1.msra.mxu0 0.0
    %94 = vmatprep.subr.mxu0 0.0
    %95 = vmatpush1.msra.mxu0 0.0
    %96 = vmatprep.subr.mxu0 0.0
    %97 = vmatpush1.msra.mxu0 0.0
    %98 = vmatprep.subr.mxu0 0.0
    %99 = vmatpush1.msra.mxu0 0.0
    %100 = vmatprep.subr.mxu0 0.0
    %101 = vmatpush1.msra.mxu0 0.0
    %102 = vmatprep.subr.mxu0 0.0
    %103 = vmatpush1.msra.mxu0 0.0
    %104 = vmatprep.subr.mxu0 0.0
    %105 = vmatpush1.msra.mxu0 0.0
    %106 = vmatprep.subr.mxu0 0.0
    %107 = vmatpush1.msra.mxu0 0.0
    %108 = vmatprep.subr.mxu0 0.0
    %109 = vmatpush1.msra.mxu0 0.0
    %110 = vmatprep.subr.mxu0 0.0
    %111 = vmatpush1.msra.mxu0 0.0
    %112 = vmatprep.subr.mxu0 0.0
    %113 = vmatpush1.msra.mxu0 0.0
    %114 = vmatprep.mubr.f32.mxu0 0.0
    %115 = vmatmul.mubr.f32.gmra.mrb[0].mxu0 %v48
    %v116 = vpop.f32.mrb[0].mxu0
    %v117 = vadd.f32 %v44, %v116
    %v118 = vpop.f32.mrb[0].mxu0
    %119 = vdwg.mxu0
    %v120 = vld [vmem:[%s6] sm:$0x1]
    %v122 = vlaneseq
    %v123 = vshrl.u32 %v122, 7
    %v124 = vsub.s32 0, %v123
    %v125 = vrot.slane %v120, %v124
    %v127 = vmul.f32 %v34, %v125
    %vm128 = vcmask 254976
    %v129 = vsel %vm128, %v127, 0.0
    %130 = vadd.xlane.f32.xlu0 %v129
    %v131 = vpop.xlane.xlu0 %130
    %s132 = sld [smem:[#allocation2]]
    %v133 = vstv %s132
    %v134 = vadd.f32 %v131, %v133
    %v135 = vld [vmem:[%s1] sm:$0xff]
    %v136 = vld [vmem:[%s1 + $0x8] sm:$0xff]
    %v139 = vunpack.c.l.s4 1966171168
    %v140 = vunpack.c.0.s8 %v139
    %v141 = vlaneseq
    %v142 = vshrl.u32 %v141, 7
    %v143 = vsub.s32 %v140, %v142
    %v144 = vrot.slane %v117, %v143
    %v145 = vcombine.high %v144, %v144
    %v147 = vunpack.c.l.s4 1966171168
    %v148 = vunpack.c.0.s8 %v147
    %v149 = vlaneseq
    %v150 = vshrl.u32 %v149, 7
    %v151 = vsub.s32 %v148, %v150
    %v152 = vrot.slane %v144, %v151
    %v154 = vunpack.c.l.s4 1966171168
    %v155 = vunpack.c.0.s8 %v154
    %v156 = vlaneseq
    %v157 = vshrl.u32 %v156, 7
    %v158 = vsub.s32 %v155, %v157
    %v159 = vrot.slane %v145, %v158
    %v160 = vlaneseq
    %v161 = vshrl.u32 %v160, 7
    %v162 = vsub.s32 0, %v161
    %v163 = vrot.slane %v152, %v162
    %v164 = vlaneseq
    %v165 = vshrl.u32 %v164, 7
    %v166 = vsub.s32 0, %v165
    %v167 = vrot.slane %v159, %v166
    %v170 = vmul.f32 %v135, %v163
    %v171 = vmul.f32 %v136, %v167
    %v172 = vld [vmem:[%s7] sm:$0xff]
    %v173 = vld [vmem:[%s7 + $0x8] sm:$0xff]
    %v174 = vld [vmem:[%s7 + $0x10] sm:$0xff]
    %v175 = vld [vmem:[%s7 + $0x18] sm:$0xff]
    %v176 = vld [vmem:[%s7 + $0x20] sm:$0xff]
    %v177 = vld [vmem:[%s7 + $0x28] sm:$0xff]
    %v178 = vld [vmem:[%s7 + $0x30] sm:$0xff]
    %v179 = vld [vmem:[%s7 + $0x38] sm:$0xff]
    %v180 = vld [vmem:[%s7 + $0x40] sm:$0xff]
    %v181 = vld [vmem:[%s7 + $0x48] sm:$0xff]
    %v182 = vld [vmem:[%s7 + $0x50] sm:$0xff]
    %v183 = vld [vmem:[%s7 + $0x58] sm:$0xff]
    %v184 = vld [vmem:[%s7 + $0x60] sm:$0xff]
    %v185 = vld [vmem:[%s7 + $0x68] sm:$0xff]
    %v186 = vld [vmem:[%s7 + $0x70] sm:$0xff]
    %v187 = vld [vmem:[%s7 + $0x78] sm:$0xff]
    %188 = vmatprep.subr.mxu0 0.0
    %189 = vmatpush1.msra.mxu0 %v172
    %190 = vmatprep.subr.mxu0 0.0
    %191 = vmatpush1.msra.mxu0 %v173
    %192 = vmatprep.subr.mxu0 0.0
    %193 = vmatpush1.msra.mxu0 %v174
    %194 = vmatprep.subr.mxu0 0.0
    %195 = vmatpush1.msra.mxu0 %v175
    %196 = vmatprep.subr.mxu0 0.0
    %197 = vmatpush1.msra.mxu0 %v176
    %198 = vmatprep.subr.mxu0 0.0
    %199 = vmatpush1.msra.mxu0 %v177
    %200 = vmatprep.subr.mxu0 0.0
    %201 = vmatpush1.msra.mxu0 %v178
    %202 = vmatprep.subr.mxu0 0.0
    %203 = vmatpush1.msra.mxu0 %v179
    %204 = vmatprep.subr.mxu0 0.0
    %205 = vmatpush1.msra.mxu0 %v180
    %206 = vmatprep.subr.mxu0 0.0
    %207 = vmatpush1.msra.mxu0 %v181
    %208 = vmatprep.subr.mxu0 0.0
    %209 = vmatpush1.msra.mxu0 %v182
    %210 = vmatprep.subr.mxu0 0.0
    %211 = vmatpush1.msra.mxu0 %v183
    %212 = vmatprep.subr.mxu0 0.0
    %213 = vmatpush1.msra.mxu0 %v184
    %214 = vmatprep.subr.mxu0 0.0
    %215 = vmatpush1.msra.mxu0 %v185
    %216 = vmatprep.subr.mxu0 0.0
    %217 = vmatpush1.msra.mxu0 %v186
    %218 = vmatprep.subr.mxu0 0.0
    %219 = vmatpush1.msra.mxu0 %v187
    %220 = vmatprep.subr.mxu0 0.0
    %221 = vmatpush1.msra.mxu0 0.0
    %222 = vmatprep.subr.mxu0 0.0
    %223 = vmatpush1.msra.mxu0 0.0
    %224 = vmatprep.subr.mxu0 0.0
    %225 = vmatpush1.msra.mxu0 0.0
    %226 = vmatprep.subr.mxu0 0.0
    %227 = vmatpush1.msra.mxu0 0.0
    %228 = vmatprep.subr.mxu0 0.0
    %229 = vmatpush1.msra.mxu0 0.0
    %230 = vmatprep.subr.mxu0 0.0
    %231 = vmatpush1.msra.mxu0 0.0
    %232 = vmatprep.subr.mxu0 0.0
    %233 = vmatpush1.msra.mxu0 0.0
    %234 = vmatprep.subr.mxu0 0.0
    %235 = vmatpush1.msra.mxu0 0.0
    %236 = vmatprep.subr.mxu0 0.0
    %237 = vmatpush1.msra.mxu0 0.0
    %238 = vmatprep.subr.mxu0 0.0
    %239 = vmatpush1.msra.mxu0 0.0
    %240 = vmatprep.subr.mxu0 0.0
    %241 = vmatpush1.msra.mxu0 0.0
    %242 = vmatprep.subr.mxu0 0.0
    %243 = vmatpush1.msra.mxu0 0.0
    %244 = vmatprep.subr.mxu0 0.0
    %245 = vmatpush1.msra.mxu0 0.0
    %246 = vmatprep.subr.mxu0 0.0
    %247 = vmatpush1.msra.mxu0 0.0
    %248 = vmatprep.subr.mxu0 0.0
    %249 = vmatpush1.msra.mxu0 0.0
    %250 = vmatprep.subr.mxu0 0.0
    %251 = vmatpush1.msra.mxu0 0.0
    %252 = vmatprep.mubr.f32.mxu0 0.0
    %253 = vmatmul.mubr.f32.gmra.mrb[0].mxu0 %v170
    %v254 = vpop.f32.mrb[0].mxu0
    %v255 = vadd.f32 0.0, %v254
    %v256 = vpop.f32.mrb[0].mxu0
    %257 = vmatprep.mubr.f32.mxu0 0.0
    %258 = vmatmul.mubr.f32.gmra.mrb[0].mxu0 %v171
    %v259 = vpop.f32.mrb[0].mxu0
    %v260 = vadd.f32 0.0, %v259
    %v261 = vpop.f32.mrb[0].mxu0
    %262 = vdwg.mxu0
    %v264 = vlaneseq
    %v265 = vshrl.u32 %v264, 7
    %v266 = vsub.s32 0, %v265
    %v267 = vrot.slane %v134, %v266
    %v268 = vlaneseq
    %v269 = vshrl.u32 %v268, 7
    %v270 = vsub.s32 1, %v269
    %v271 = vrot.slane %v134, %v270
    %v274 = vadd.f32 %v255, %v267
    %v275 = vadd.f32 %v260, %v271
    %v276 = vld [vmem:[%s2] sm:$0xff]
    %v277 = vld [vmem:[%s2 + $0x8] sm:$0xff]
    %vm278 = vcmp.eq.f32.partialorder %v276, 0.0
    %vm279 = vcmp.eq.f32.partialorder %v277, 0.0
    %v280 = vsel %vm278, -1e+30, %v274
    %v281 = vsel %vm279, -1e+30, %v275
    %vm282 = vcmask 64512
    %v283 = vsel %vm282, %v280, -inf
    %v284 = vrot.slane %v283, 4
    %v285 = vmax.f32 %v283, %v284
    %v286 = vrot.slane %v285, 2
    %v287 = vmax.f32 %v285, %v286
    %v288 = vrot.slane %v287, 1
    %v289 = vmax.f32 %v287, %v288
    %v290 = vsel %vm282, %v281, -inf
    %v291 = vrot.slane %v290, 4
    %v292 = vmax.f32 %v290, %v291
    %v293 = vrot.slane %v292, 2
    %v294 = vmax.f32 %v292, %v293
    %v295 = vrot.slane %v294, 1
    %v296 = vmax.f32 %v294, %v295
    %v297 = vsub.f32 %v280, %v289
    %v298 = vsub.f32 %v281, %v296
    %v299 = vmul.f32 %v297, 1.442695
    %v300 = vpow.pop %v299
    %v301 = vmul.f32 %v298, 1.442695
    %v302 = vpow.pop %v301
    %v303 = vsel %vm282, %v300, 0.0
    %v304 = vrot.slane %v303, 4
    %v305 = vadd.f32 %v303, %v304
    %v306 = vrot.slane %v305, 2
    %v307 = vadd.f32 %v305, %v306
    %v308 = vrot.slane %v307, 1
    %v309 = vadd.f32 %v307, %v308
    %v310 = vsel %vm282, %v302, 0.0
    %v311 = vrot.slane %v310, 4
    %v312 = vadd.f32 %v310, %v311
    %v313 = vrot.slane %v312, 2
    %v314 = vadd.f32 %v312, %v313
    %v315 = vrot.slane %v314, 1
    %v316 = vadd.f32 %v314, %v315
    %v317 = vrcp.pop %v309
    %v318 = vrcp.pop %v316
    %v319 = vmul.f32 %v309, %v317
    %v320 = vmul.f32 %v316, %v318
    %v321 = vsub.f32 2.0, %v319
    %v322 = vsub.f32 2.0, %v320
    %v323 = vmul.f32 %v317, %v321
    %v324 = vmul.f32 %v318, %v322
    %v325 = vmul.f32 %v300, %v323
    %v326 = vmul.f32 %v302, %v324
    %v327 = vld [vmem:[%s3] sm:$0x3]
    %v330 = vunpack.c.l.s4 1966171168
    %v331 = vunpack.c.0.s8 %v330
    %v332 = vlaneseq
    %v333 = vshrl.u32 %v332, 7
    %v334 = vsub.s32 %v331, %v333
    %v335 = vrot.slane %v327, %v334
    %v336 = vcombine.high %v335, %v335
    %v338 = vunpack.c.l.s4 1966171168
    %v339 = vunpack.c.0.s8 %v338
    %v340 = vlaneseq
    %v341 = vshrl.u32 %v340, 7
    %v342 = vsub.s32 %v339, %v341
    %v343 = vrot.slane %v335, %v342
    %v345 = vunpack.c.l.s4 1966171168
    %v346 = vunpack.c.0.s8 %v345
    %v347 = vlaneseq
    %v348 = vshrl.u32 %v347, 7
    %v349 = vsub.s32 %v346, %v348
    %v350 = vrot.slane %v336, %v349
    %v351 = vlaneseq
    %v352 = vshrl.u32 %v351, 7
    %v353 = vsub.s32 0, %v352
    %v354 = vrot.slane %v343, %v353
    %v355 = vlaneseq
    %v356 = vshrl.u32 %v355, 7
    %v357 = vsub.s32 0, %v356
    %v358 = vrot.slane %v350, %v357
    %v361 = vmul.f32 %v325, %v354
    %v362 = vmul.f32 %v326, %v358
    %v363 = vsel %vm282, %v361, 0.0
    %364 = vadd.xlane.f32.xlu0 %v363
    %v365 = vpop.xlane.xlu0 %364
    %v366 = vsel %vm282, %v362, 0.0
    %367 = vadd.xlane.f32.xlu0 %v366
    %v368 = vpop.xlane.xlu0 %367
    %v371 = vlaneseq
    %v372 = vand.u32 %v371, 127
    %v373 = vlaneseq
    %v374 = vshrl.u32 %v373, 7
    %v375 = vsub.s32 %v372, %v374
    %v376 = vrot.slane %v365, %v375
    %v377 = vlaneseq
    %v378 = vshrl.u32 %v377, 7
    %v379 = vsub.s32 %v372, %v378
    %v380 = vrot.slane %v368, %v379
    %vm381 = vcmask 1041409
    %v382 = vsel %vm381, %v380, %v376
    %vm384 = vcmask 58368
    %385 = vst.msk [vmem:[#allocation3] sm:$0x3] %vm384, %v382
    // Predicated region
    $region38: #{trans_cell.1} parent=1 // pred_check
      _
    $region39: #{trans_cell.1} parent=1 // pred_check_branch
      %387 = sbr.rel (0) target = $region41
    $region40: #{trans_cell.1} parent=1 // pred_region
      %s389 = ssub.s32 32, 32
      %390 = vsyncadd [#allocation4], %s389
      %s392 = sshll.u32 [#allocation3], 4
      %s393 = int_to_ptr.vmem [resolvable:$true] %s392
      %395 = dma.vmem_to_hbm [thread:$0]  %s393, 32, %s9, [#allocation4]
    $region41: #{trans_cell.1} parent=1 // pred_fallthru
      _
    // Predicated region
    $region42: #{trans_cell.1} parent=1 // pred_check
      _
    $region43: #{trans_cell.1} parent=1 // pred_check_branch
      %397 = sbr.rel (0) target = $region45
    $region44: #{trans_cell.1} parent=1 // pred_region
      %398 = dma.done [#allocation4], 32
    $region45: #{trans_cell.1} parent=1 // pred_fallthru
      _
    %399 = vsyncpa [#allocation4], 1

</llo_original>
